<compile_context>
chip_gen: v7x
topology: tpu7x:2x2x1
jax: 0.10.0
libtpu: 0.0.40
codegen_flags: <defaults>
</compile_context>

<pallas_src>
import functools

import jax
import jax.numpy as jnp
from jax.experimental import pallas as pl
from jax.experimental.pallas import tpu as pltpu

# --- problem sizes (small, consistent with the module's [1,1,H,W] contract) ---
H = W = 16          # image grid
N_DET = 16          # circular detector count
N_TIME = 16         # time samples per detector
K = H * W           # 256  (flattened image length)
M = N_DET * N_TIME  # 256  (flattened sinogram length)


# ----------------------------------------------------------------------------
# Single operator application (the module's forward): one full-block matvec.
# ----------------------------------------------------------------------------
def _lpd_matvec_kernel(x_ref, a_ref, o_ref):
    # x_ref: (1, K) full image row vector, a_ref: (K, M) full operator,
    # o_ref: (1, M) full output row.  One MXU matmul, no grid, no pipelining.
    o_ref[...] = jnp.dot(
        x_ref[...], a_ref[...], preferred_element_type=jnp.float32
    )


def _matvec_row(x_flat, A_mat):
    """Compute x_flat @ A_mat with a single-block Pallas kernel.

    x_flat: (1, k); A_mat: (k, m).  Whole problem lives in VMEM (A is only
    k*m*4 bytes = 256 KiB at these sizes), so no grid / pipeline is used.
    TODO(synk): if multiple channels / batch elements ever flow through,
    stack them into a (B, k) LHS (B multiple of 8, ideally >=128) instead of
    calling this 1-row matvec repeatedly, and mark the batch grid axis
    "parallel" for v7x's 2 TensorCores.
    """
    k, m = A_mat.shape
    assert k % 8 == 0 and m % 128 == 0
    return pl.pallas_call(
        _lpd_matvec_kernel,
        out_shape=jax.ShapeDtypeStruct((1, m), jnp.float32),
        in_specs=[
            pl.BlockSpec((1, k), lambda: (0, 0)),   # whole image row
            pl.BlockSpec((k, m), lambda: (0, 0)),   # whole operator
        ],
        out_specs=pl.BlockSpec((1, m), lambda: (0, 0)),
        cost_estimate=pl.CostEstimate(
            flops=2 * k * m,
            bytes_accessed=(k * m + k + m) * 4,
            transcendentals=0,
        ),
    )(x_flat, A_mat)


def make_circ_pat_operator():
    """Deterministic synthetic circular-PAT system matrix and its transpose.

    Returns (A, A_T) with A: (H*W, N_DET*N_TIME).  A_T is materialized once
    here so the adjoint path never re-transposes A in HBM per call.
    """
    key = jax.random.PRNGKey(42)
    A = jax.random.normal(key, (K, M), dtype=jnp.float32) / jnp.sqrt(
        jnp.float32(K)
    )
    A_T = jnp.asarray(A.T)  # cached adjoint operator
    return A, A_T


@functools.partial(jax.jit, static_argnames=("adjoint",))
def lpd_iter_forward(x, A, A_T, adjoint=False):
    """Pallas equivalent of LPDIterModule.forward (one fused jit dispatch).

    x: (1, 1, H, W) if adjoint=False (image -> sinogram),
       (1, 1, N_DET, N_TIME) if adjoint=True (sinogram -> image).
    """
    xi = x[0, 0]                                    # x[0, 0] as in the module
    x_flat = xi.reshape(1, -1).astype(jnp.float32)  # glue: flatten to row vec
    if adjoint:
        # circPAT.back == A^T applied (adjoint of the forward projection)
        y_flat = _matvec_row(x_flat, A_T)
        y = y_flat.reshape(H, W)
    else:
        # circPAT.forw == A applied
        y_flat = _matvec_row(x_flat, A)
        y = y_flat.reshape(N_DET, N_TIME)
    return y[None, None, :]                         # y[None, None, :]


# ----------------------------------------------------------------------------
# Fused multi-iteration kernel: x <- A^T (A x), n_iters times, in ONE
# pallas_call.  A / A_T are DMA'd once (constant block index across the
# iteration grid axis) and stay VMEM-resident; the iterate is carried in a
# VMEM scratch.  This is the building block a full LPD reconstruction would
# use (the learned primal/dual updates would slot in around the two dots).
# ----------------------------------------------------------------------------
def _lpd_normal_iter_kernel(x_ref, a_ref, at_ref, o_ref, state_ref):
    it = pl.program_id(0)

    @pl.when(it == 0)
    def _():
        state_ref[...] = x_ref[...]

    sino = jnp.dot(state_ref[...], a_ref[...],
                   preferred_element_type=jnp.float32)          # forw
    state_ref[...] = jnp.dot(sino, at_ref[...],
                             preferred_element_type=jnp.float32)  # back

    @pl.when(it == pl.num_programs(0) - 1)
    def _():
        o_ref[...] = state_ref[...]


@functools.partial(jax.jit, static_argnames=("n_iters",))
def lpd_normal_iterations(x, A, A_T, n_iters=3):
    """Apply the normal operator A^T A to x[0,0] n_iters times, fused."""
    xi = x[0, 0]
    x_flat = xi.reshape(1, -1).astype(jnp.float32)
    y_flat = pl.pallas_call(
        _lpd_normal_iter_kernel,
        out_shape=jax.ShapeDtypeStruct((1, K), jnp.float32),
        grid_spec=pltpu.PrefetchScalarGridSpec(
            num_scalar_prefetch=0,
            grid=(n_iters,),
            in_specs=[
                pl.BlockSpec((1, K), lambda it: (0, 0)),   # iterate (DMA once)
                pl.BlockSpec((K, M), lambda it: (0, 0)),   # A resident
                pl.BlockSpec((M, K), lambda it: (0, 0)),   # A_T resident
            ],
            out_specs=pl.BlockSpec((1, K), lambda it: (0, 0)),
            scratch_shapes=[pltpu.VMEM((1, K), jnp.float32)],
        ),
        compiler_params=pltpu.CompilerParams(
            dimension_semantics=("arbitrary",),  # iterations are sequential
        ),
        cost_estimate=pl.CostEstimate(
            flops=n_iters * 2 * (K * M + M * K),
            bytes_accessed=(K * M + M * K + K + K) * 4,
            transcendentals=0,
        ),
    )(x_flat, A, A_T)
    return y_flat.reshape(1, 1, H, W)


if __name__ == "__main__":
    A, A_T = make_circ_pat_operator()

    key = jax.random.PRNGKey(0)
    x = jax.random.normal(key, (1, 1, H, W), dtype=jnp.float32)

    # forward (adjoint=False) path: image -> sinogram
    y = lpd_iter_forward(x, A, A_T, adjoint=False)
    y = jax.block_until_ready(y)
    assert y.shape == (1, 1, N_DET, N_TIME), y.shape

    # pure-JAX reference check
    y_ref = (x[0, 0].reshape(1, -1) @ A).reshape(1, 1, N_DET, N_TIME)
    assert jnp.allclose(y, y_ref, atol=1e-5, rtol=1e-5)

    # adjoint path sanity check as well: sinogram -> image
    y_adj = lpd_iter_forward(y, A, A_T, adjoint=True)
    y_adj = jax.block_until_ready(y_adj)
    assert y_adj.shape == (1, 1, H, W), y_adj.shape
    y_adj_ref = (y[0, 0].reshape(1, -1) @ A.T).reshape(1, 1, H, W)
    assert jnp.allclose(y_adj, y_adj_ref, atol=1e-5, rtol=1e-5)

    # fused multi-iteration (A resident in VMEM across the iteration grid)
    n_iters = 3
    z = lpd_normal_iterations(x, A, A_T, n_iters=n_iters)
    z = jax.block_until_ready(z)
    z_ref = x[0, 0].reshape(1, -1)
    for _ in range(n_iters):
        z_ref = (z_ref @ A) @ A.T
    z_ref = z_ref.reshape(1, 1, H, W)
    assert z.shape == (1, 1, H, W), z.shape
    assert jnp.allclose(z, z_ref, atol=1e-4, rtol=1e-4)

    print("KERNEL_OK")
</pallas_src>

<mosaic_0001>
module attributes {stable_mosaic.version = 11 : i64} {
  func.func @_lpd_matvec_kernel(%arg0: memref<1x256xf32, #tpu.memory_space<vmem>>, %arg1: memref<256x256xf32, #tpu.memory_space<vmem>>, %arg2: memref<1x256xf32, #tpu.memory_space<vmem>>) attributes {dimension_semantics = [], scalar_prefetch = 0 : i64, scratch_operands = 0 : i64, tpu.core_type = #tpu.core_type<tc>} {
    %c0 = arith.constant 0 : index
    %c0_0 = arith.constant 0 : index
    %0 = vector.load %arg0[%c0, %c0_0] : memref<1x256xf32, #tpu.memory_space<vmem>>, vector<1x256xf32>
    %c0_1 = arith.constant 0 : index
    %c0_2 = arith.constant 0 : index
    %1 = vector.load %arg1[%c0_1, %c0_2] : memref<256x256xf32, #tpu.memory_space<vmem>>, vector<256x256xf32>
    %cst = arith.constant dense<0.000000e+00> : vector<1x256xf32>
    %2 = tpu.matmul %0, %1, %cst {dimension_numbers = #tpu.dot_dimension_numbers<[1], [0], [0], [1], [0, 0, 1, 1], [], []>} : vector<1x256xf32>, vector<256x256xf32>, vector<1x256xf32> -> vector<1x256xf32>
    %c0_3 = arith.constant 0 : index
    %c0_4 = arith.constant 0 : index
    %3 = vector.load %arg2[%c0_3, %c0_4] : memref<1x256xf32, #tpu.memory_space<vmem>>, vector<1x256xf32>
    tpu.vector_store %arg2[%c0_3, %c0_4], %2 {strides = array<i32>} : memref<1x256xf32, #tpu.memory_space<vmem>>, vector<1x256xf32>,
    return
  }
}

</mosaic_0001>

<llo_original>
// kernel: squeeze.1
$region0: #{squeeze.1}
  %s0 = inlined_call_operand.hbm [shape: f32[1,1,16,16], index: 0, kind: input, shape index: {}]
  %s1 = inlined_call_operand.vmem [shape: f32[1,256], index: 1, kind: output, shape index: {}]
  $region1: #{squeeze.1} parent=0
    #allocation0 [shape = 'u8[8192]{0}', space=vmem, size = 0x2000, scoped, tag = 'operand span for operand 0']
    #allocation1 [shape = 's32[1]{0}', space=sflag, size = 0x4, scoped, tag = 'scoped memory for squeeze.1']
    #allocation2 [shape = 'u8[8192]{0}', space=vmem, size = 0x2000, scoped, tag = 'scoped mem for output reshape']
    %2 = vsyncpa [#allocation1], 0
    %s4 = ssub.s32 256, 256
    %5 = vsyncadd [#allocation1], %s4
    %s7 = sshll.u32 [#allocation0], 4
    %s8 = int_to_ptr.vmem [resolvable:$true] %s7
    %10 = dma.hbm_to_vmem [thread:$0]  %s0, 256, %s8, [#allocation1]
    %11 = dma.done [#allocation1], 256
    %s12 = smov 3
    %v13 = vld [vmem:[#allocation0] ss:$8 sm:%s12]
    %vm14 = vcmask 130048
    %15 = vst.msk [vmem:[#allocation2] ss:$8 sm:$0x3] %vm14, %v13
    %s16 = scalar_lea.vmem [#allocation0], 7
    %s17 = smov 3
    %v18 = vld [vmem:[%s16] ss:$8 sm:%s17]
    %19 = vrot.lane.b32.xlu0 %v18, 112
    %v20 = vpop.permute.xlu0 %19
    %vm21 = vcmask 1048448
    %22 = vst.msk [vmem:[#allocation2] ss:$8 sm:$0x3] %vm21, %v20
    %s23 = scalar_lea.vmem [#allocation0], 6
    %s24 = smov 3
    %v25 = vld [vmem:[%s23] ss:$8 sm:%s24]
    %26 = vrot.lane.b32.xlu0 %v25, 96
    %v27 = vpop.permute.xlu0 %26
    %vm28 = vcmask 917248
    %29 = vst.msk [vmem:[#allocation2] ss:$8 sm:$0x3] %vm28, %v27
    %s30 = scalar_lea.vmem [#allocation0], 5
    %s31 = smov 3
    %v32 = vld [vmem:[%s30] ss:$8 sm:%s31]
    %33 = vrot.lane.b32.xlu0 %v32, 80
    %v34 = vpop.permute.xlu0 %33
    %vm35 = vcmask 786048
    %36 = vst.msk [vmem:[#allocation2] ss:$8 sm:$0x3] %vm35, %v34
    %s37 = scalar_lea.vmem [#allocation0], 4
    %s38 = smov 3
    %v39 = vld [vmem:[%s37] ss:$8 sm:%s38]
    %40 = vrot.lane.b32.xlu0 %v39, 64
    %v41 = vpop.permute.xlu0 %40
    %vm42 = vcmask 654848
    %43 = vst.msk [vmem:[#allocation2] ss:$8 sm:$0x3] %vm42, %v41
    %s44 = scalar_lea.vmem [#allocation0], 3
    %s45 = smov 3
    %v46 = vld [vmem:[%s44] ss:$8 sm:%s45]
    %47 = vrot.lane.b32.xlu0 %v46, 48
    %v48 = vpop.permute.xlu0 %47
    %vm49 = vcmask 523648
    %50 = vst.msk [vmem:[#allocation2] ss:$8 sm:$0x3] %vm49, %v48
    %s51 = scalar_lea.vmem [#allocation0], 2
    %s52 = smov 3
    %v53 = vld [vmem:[%s51] ss:$8 sm:%s52]
    %54 = vrot.lane.b32.xlu0 %v53, 32
    %v55 = vpop.permute.xlu0 %54
    %vm56 = vcmask 392448
    %57 = vst.msk [vmem:[#allocation2] ss:$8 sm:$0x3] %vm56, %v55
    %s58 = scalar_lea.vmem [#allocation0], 1
    %s59 = smov 3
    %v60 = vld [vmem:[%s58] ss:$8 sm:%s59]
    %61 = vrot.lane.b32.xlu0 %v60, 16
    %v62 = vpop.permute.xlu0 %61
    %vm63 = vcmask 261248
    %64 = vst.msk [vmem:[#allocation2] ss:$8 sm:$0x3] %vm63, %v62
    %s66 = sshllo.u32 0, 1
    %v68 = vld [vmem:[#allocation2] sm:%s66]
    %s69 = sshllo.u32 0, 1
    %70 = vst [vmem:[%s1] sm:%s69] %v68
    %s71 = scalar_lea.vmem [#allocation2], 8
    %v72 = vld [vmem:[%s71] sm:%s66]
    %s73 = sshllo.u32 0, 1
    %s74 = scalar_lea.vmem %s1, 1
    %75 = vst [vmem:[%s74] sm:%s73] %v72
    %76 = vsyncpa [#allocation1], 1

// kernel: lpd_iter_forward.1
$region0: #{lpd_iter_forward.1}
  #allocation0 [shape = 'u32[]', space=smem, size = 0x4, offset = 0x4, fixed_abs, tag = 'smem constant byte address 0x4 - core index']
  #allocation1 [shape = 'u32[144,128]{1,0:T(1,128)}', space=vmem, size = 0x12000, scoped, tag = 'internal scratch']
  %s0 = inlined_call_operand.vmem [shape: f32[1,256], index: 0, kind: input, shape index: {}]
  %s1 = inlined_call_operand.hbm [shape: f32[256,256], index: 1, kind: input, shape index: {}]
  %s2 = inlined_call_operand.vmem [shape: f32[1,256], index: 2, kind: output, shape index: {}]
  %s3 = sld [smem:[#allocation0]]
  $region22: #{lpd_iter_forward.1} parent=0
    _
  %s5 = ssub.s32 1, %s3
  %s6 = scalar_select 0, %s5, %s3
  $region1: #{lpd_iter_forward.1} parent=0
    #allocation2 [shape = 'u8[262144]{0}', space=vmem, size = 0x40000, scoped, tag = 'input window, operand 1, single buffered']
    #allocation3 [shape = 's32[1]{0}', space=sflag, size = 0x4, scoped, tag = 'scoped memory for lpd_iter_forward.1']
    %7 = vsyncpa [#allocation3], 0
    // Predicated region
    $region2: #{lpd_iter_forward.1} parent=1 // pred_check
      _
    $region3: #{lpd_iter_forward.1} parent=1 // pred_check_branch
      %9 = sbr.rel (0) target = $region5
    $region4: #{lpd_iter_forward.1} parent=1 // pred_region
      _
    $region5: #{lpd_iter_forward.1} parent=1 // pred_fallthru
      _
    // Predicated region
    $region6: #{lpd_iter_forward.1} parent=1 // pred_check
      _
    $region7: #{lpd_iter_forward.1} parent=1 // pred_check_branch
      %11 = sbr.rel (0) target = $region9
    $region8: #{lpd_iter_forward.1} parent=1 // pred_region
      %s13 = ssub.s32 8192, 8192
      %14 = vsyncadd [#allocation3], %s13
      %s15 = sshll.u32 [#allocation2], 4
      %s16 = int_to_ptr.vmem [resolvable:$true] %s15
      %21 = dma.hbm_to_vmem [thread:$0]  %s1, 8192, %s16, [#allocation3], 256, 256, 16
    $region9: #{lpd_iter_forward.1} parent=1 // pred_fallthru
      _
    // Predicated region
    $region10: #{lpd_iter_forward.1} parent=1 // pred_check
      _
    $region11: #{lpd_iter_forward.1} parent=1 // pred_check_branch
      %23 = sbr.rel (0) target = $region13
    $region12: #{lpd_iter_forward.1} parent=1 // pred_region
      %24 = dma.done [#allocation3], 8192
    $region13: #{lpd_iter_forward.1} parent=1 // pred_fallthru
      _
    %v25 = vld [vmem:[%s0] sm:$0x3]
    %v26 = vld [vmem:[#allocation2] sm:$0xff]
    %v27 = vld [vmem:[#allocation2 + $0x8] sm:$0xff]
    %v28 = vld [vmem:[#allocation2 + $0x10] sm:$0xff]
    %v29 = vld [vmem:[#allocation2 + $0x18] sm:$0xff]
    %v30 = vld [vmem:[#allocation2 + $0x20] sm:$0xff]
    %v31 = vld [vmem:[#allocation2 + $0x28] sm:$0xff]
    %v32 = vld [vmem:[#allocation2 + $0x30] sm:$0xff]
    %v33 = vld [vmem:[#allocation2 + $0x38] sm:$0xff]
    %v34 = vld [vmem:[#allocation2 + $0x40] sm:$0xff]
    %v35 = vld [vmem:[#allocation2 + $0x48] sm:$0xff]
    %v36 = vld [vmem:[#allocation2 + $0x50] sm:$0xff]
    %v37 = vld [vmem:[#allocation2 + $0x58] sm:$0xff]
    %v38 = vld [vmem:[#allocation2 + $0x60] sm:$0xff]
    %v39 = vld [vmem:[#allocation2 + $0x68] sm:$0xff]
    %v40 = vld [vmem:[#allocation2 + $0x70] sm:$0xff]
    %v41 = vld [vmem:[#allocation2 + $0x78] sm:$0xff]
    %v42 = vld [vmem:[#allocation2 + $0x80] sm:$0xff]
    %v43 = vld [vmem:[#allocation2 + $0x88] sm:$0xff]
    %v44 = vld [vmem:[#allocation2 + $0x90] sm:$0xff]
    %v45 = vld [vmem:[#allocation2 + $0x98] sm:$0xff]
    %v46 = vld [vmem:[#allocation2 + $0xa0] sm:$0xff]
    %v47 = vld [vmem:[#allocation2 + $0xa8] sm:$0xff]
    %v48 = vld [vmem:[#allocation2 + $0xb0] sm:$0xff]
    %v49 = vld [vmem:[#allocation2 + $0xb8] sm:$0xff]
    %v50 = vld [vmem:[#allocation2 + $0xc0] sm:$0xff]
    %v51 = vld [vmem:[#allocation2 + $0xc8] sm:$0xff]
    %v52 = vld [vmem:[#allocation2 + $0xd0] sm:$0xff]
    %v53 = vld [vmem:[#allocation2 + $0xd8] sm:$0xff]
    %v54 = vld [vmem:[#allocation2 + $0xe0] sm:$0xff]
    %v55 = vld [vmem:[#allocation2 + $0xe8] sm:$0xff]
    %v56 = vld [vmem:[#allocation2 + $0xf0] sm:$0xff]
    %v57 = vld [vmem:[#allocation2 + $0xf8] sm:$0xff]
    %v58 = vld [vmem:[#allocation2 + $0x100] sm:$0xff]
    %v59 = vld [vmem:[#allocation2 + $0x108] sm:$0xff]
    %v60 = vld [vmem:[#allocation2 + $0x110] sm:$0xff]
    %v61 = vld [vmem:[#allocation2 + $0x118] sm:$0xff]
    %v62 = vld [vmem:[#allocation2 + $0x120] sm:$0xff]
    %v63 = vld [vmem:[#allocation2 + $0x128] sm:$0xff]
    %v64 = vld [vmem:[#allocation2 + $0x130] sm:$0xff]
    %v65 = vld [vmem:[#allocation2 + $0x138] sm:$0xff]
    %v66 = vld [vmem:[#allocation2 + $0x140] sm:$0xff]
    %v67 = vld [vmem:[#allocation2 + $0x148] sm:$0xff]
    %v68 = vld [vmem:[#allocation2 + $0x150] sm:$0xff]
    %v69 = vld [vmem:[#allocation2 + $0x158] sm:$0xff]
    %v70 = vld [vmem:[#allocation2 + $0x160] sm:$0xff]
    %v71 = vld [vmem:[#allocation2 + $0x168] sm:$0xff]
    %v72 = vld [vmem:[#allocation2 + $0x170] sm:$0xff]
    %v73 = vld [vmem:[#allocation2 + $0x178] sm:$0xff]
    %v74 = vld [vmem:[#allocation2 + $0x180] sm:$0xff]
    %v75 = vld [vmem:[#allocation2 + $0x188] sm:$0xff]
    %v76 = vld [vmem:[#allocation2 + $0x190] sm:$0xff]
    %v77 = vld [vmem:[#allocation2 + $0x198] sm:$0xff]
    %v78 = vld [vmem:[#allocation2 + $0x1a0] sm:$0xff]
    %v79 = vld [vmem:[#allocation2 + $0x1a8] sm:$0xff]
    %v80 = vld [vmem:[#allocation2 + $0x1b0] sm:$0xff]
    %v81 = vld [vmem:[#allocation2 + $0x1b8] sm:$0xff]
    %v82 = vld [vmem:[#allocation2 + $0x1c0] sm:$0xff]
    %v83 = vld [vmem:[#allocation2 + $0x1c8] sm:$0xff]
    %v84 = vld [vmem:[#allocation2 + $0x1d0] sm:$0xff]
    %v85 = vld [vmem:[#allocation2 + $0x1d8] sm:$0xff]
    %v86 = vld [vmem:[#allocation2 + $0x1e0] sm:$0xff]
    %v87 = vld [vmem:[#allocation2 + $0x1e8] sm:$0xff]
    %v88 = vld [vmem:[#allocation2 + $0x1f0] sm:$0xff]
    %v89 = vld [vmem:[#allocation2 + $0x1f8] sm:$0xff]
    %v91 = vlaneseq
    %v92 = vshrl.u32 %v91, 7
    %v93 = vsub.s32 0, %v92
    %v94 = vrot.slane %v25, %v93
    %v95 = vlaneseq
    %v96 = vshrl.u32 %v95, 7
    %v97 = vsub.s32 1, %v96
    %v98 = vrot.slane %v25, %v97
    %101 = vmatprep.subr.mxu0 %v27
    %102 = vmatpush1.msra.mxu0 %v26
    %103 = vmatprep.subr.mxu0 %v29
    %104 = vmatpush1.msra.mxu0 %v28
    %105 = vmatprep.subr.mxu0 %v31
    %106 = vmatpush1.msra.mxu0 %v30
    %107 = vmatprep.subr.mxu0 %v33
    %108 = vmatpush1.msra.mxu0 %v32
    %109 = vmatprep.subr.mxu0 %v35
    %110 = vmatpush1.msra.mxu0 %v34
    %111 = vmatprep.subr.mxu0 %v37
    %112 = vmatpush1.msra.mxu0 %v36
    %113 = vmatprep.subr.mxu0 %v39
    %114 = vmatpush1.msra.mxu0 %v38
    %115 = vmatprep.subr.mxu0 %v41
    %116 = vmatpush1.msra.mxu0 %v40
    %117 = vmatprep.subr.mxu0 %v43
    %118 = vmatpush1.msra.mxu0 %v42
    %119 = vmatprep.subr.mxu0 %v45
    %120 = vmatpush1.msra.mxu0 %v44
    %121 = vmatprep.subr.mxu0 %v47
    %122 = vmatpush1.msra.mxu0 %v46
    %123 = vmatprep.subr.mxu0 %v49
    %124 = vmatpush1.msra.mxu0 %v48
    %125 = vmatprep.subr.mxu0 %v51
    %126 = vmatpush1.msra.mxu0 %v50
    %127 = vmatprep.subr.mxu0 %v53
    %128 = vmatpush1.msra.mxu0 %v52
    %129 = vmatprep.subr.mxu0 %v55
    %130 = vmatpush1.msra.mxu0 %v54
    %131 = vmatprep.subr.mxu0 %v57
    %132 = vmatpush1.msra.mxu0 %v56
    %133 = vmatprep.subr.mxu0 %v59
    %134 = vmatpush1.msra.mxu0 %v58
    %135 = vmatprep.subr.mxu0 %v61
    %136 = vmatpush1.msra.mxu0 %v60
    %137 = vmatprep.subr.mxu0 %v63
    %138 = vmatpush1.msra.mxu0 %v62
    %139 = vmatprep.subr.mxu0 %v65
    %140 = vmatpush1.msra.mxu0 %v64
    %141 = vmatprep.subr.mxu0 %v67
    %142 = vmatpush1.msra.mxu0 %v66
    %143 = vmatprep.subr.mxu0 %v69
    %144 = vmatpush1.msra.mxu0 %v68
    %145 = vmatprep.subr.mxu0 %v71
    %146 = vmatpush1.msra.mxu0 %v70
    %147 = vmatprep.subr.mxu0 %v73
    %148 = vmatpush1.msra.mxu0 %v72
    %149 = vmatprep.subr.mxu0 %v75
    %150 = vmatpush1.msra.mxu0 %v74
    %151 = vmatprep.subr.mxu0 %v77
    %152 = vmatpush1.msra.mxu0 %v76
    %153 = vmatprep.subr.mxu0 %v79
    %154 = vmatpush1.msra.mxu0 %v78
    %155 = vmatprep.subr.mxu0 %v81
    %156 = vmatpush1.msra.mxu0 %v80
    %157 = vmatprep.subr.mxu0 %v83
    %158 = vmatpush1.msra.mxu0 %v82
    %159 = vmatprep.subr.mxu0 %v85
    %160 = vmatpush1.msra.mxu0 %v84
    %161 = vmatprep.subr.mxu0 %v87
    %162 = vmatpush1.msra.mxu0 %v86
    %163 = vmatprep.subr.mxu0 %v89
    %164 = vmatpush1.msra.mxu0 %v88
    %165 = vmatprep.mubr.f32.mxu0 %v98
    %166 = vmatmul.mubr.f32.gmra.mrb[0].mxu0 %v94
    %v167 = vpop.f32.mrb[0].mxu0
    %v168 = vadd.f32 0.0, %v167
    %v169 = vpop.f32.mrb[0].mxu0
    %v170 = vadd.f32 0.0, %v169
    %171 = vdwg.mxu0
    %v174 = vcombine.low %v168, %v170
    %v176 = vunpack.c.l.s4 1966171168
    %v177 = vunpack.c.0.s8 %v176
    %v178 = vlaneseq
    %v179 = vshrl.u32 %v178, 7
    %v180 = vsub.s32 %v177, %v179
    %v181 = vrot.slane %v174, %v180
    %v183 = vunpack.c.l.s4 1966171168
    %v184 = vunpack.c.0.s8 %v183
    %v185 = vlaneseq
    %v186 = vshrl.u32 %v185, 7
    %v187 = vsub.s32 %v184, %v186
    %v188 = vrot.slane %v181, %v187
    %v190 = vlaneseq
    %vm191 = vcmp.ge.s32.totalorder %v190, 0
    %vm192 = vcmp.lt.s32.totalorder %v190, 256
    %vm193 = vmand %vm191, %vm192
    %194 = vst.msk [vmem:[%s2] sm:$0x3] %vm193, %v188
    // Predicated region
    $region14: #{lpd_iter_forward.1} parent=1 // pred_check
      _
    $region15: #{lpd_iter_forward.1} parent=1 // pred_check_branch
      %196 = sbr.rel (0) target = $region17
    $region16: #{lpd_iter_forward.1} parent=1 // pred_region
      _
    $region17: #{lpd_iter_forward.1} parent=1 // pred_fallthru
      _
    // Predicated region
    $region18: #{lpd_iter_forward.1} parent=1 // pred_check
      _
    $region19: #{lpd_iter_forward.1} parent=1 // pred_check_branch
      %198 = sbr.rel (0) target = $region21
    $region20: #{lpd_iter_forward.1} parent=1 // pred_region
      _
    $region21: #{lpd_iter_forward.1} parent=1 // pred_fallthru
      _
    %199 = vsyncpa [#allocation3], 1

</llo_original>
